<compile_context>
chip_gen: v5e
topology: v5e:2x2
jax: 0.10.0
libtpu: 0.0.40
codegen_flags: <defaults>
</compile_context>

<pallas_src>
import functools
import math

import jax
import jax.numpy as jnp
from jax.experimental import pallas as pl
from jax.experimental.pallas import tpu as pltpu


_ACTIVATIONS = {
    "tanh": jnp.tanh,
    "relu": jax.nn.relu,
    "sigmoid": jax.nn.sigmoid,
}


def _round_up(n, m):
    return m * pl.cdiv(n, m)


def _default_act_dtype():
    """bf16 activations on chips with a bf16 EUP (v6e / v7x); f32 otherwise."""
    try:
        kind = jax.devices()[0].device_kind.lower()
    except Exception:
        return jnp.float32
    if any(tag in kind for tag in ("v6", "v7", "7x")):
        return jnp.bfloat16
    return jnp.float32


def _value_kernel(x_ref, w1_ref, w2_ref, aux_ref, out_ref, *, act, act_dtype):
    """One batch tile.

    x_ref  : (TB, state_dim) f32   batch-major input tile
    w1_ref : (H, state_dim)  bf16  torch (out_features, in_features) layout
    w2_ref : (H, H)          bf16
    aux_ref: (H, 8)          f32   col0=b1, col1=b2, col2=w3 row, col3=b3/H
    out_ref: (1, TB)         f32   sigmoid(value), lane-dense (batch on lanes)
    """
    aux = aux_ref[...]                          # (H, 8) f32
    x = x_ref[...].astype(jnp.bfloat16)         # MXU inputs in bf16

    # Layer 1: act(W1 @ x^T + b1) -> (H, TB).  Contract state_dim on both
    # operands; Mosaic handles the small in-VMEM transpose of the x tile.
    h = jax.lax.dot_general(
        w1_ref[...], x, (((1,), (1,)), ((), ())),
        preferred_element_type=jnp.float32)
    h = act((h + aux[:, 0:1]).astype(act_dtype))

    # Layer 2: act(W2 @ h + b2) -> (H, TB), f32 accumulation on the MXU.
    h = jnp.dot(w2_ref[...], h.astype(jnp.bfloat16),
                preferred_element_type=jnp.float32)
    h = act((h + aux[:, 1:2]).astype(act_dtype))

    # Value head (out_features == 1): VPU multiply + sublane reduction instead
    # of an N=1 MXU matmul.  aux[:, 3] holds b3/H so summing H sublanes adds
    # exactly b3 (b3 is zeroed by the module; folding is exact here).
    v = jnp.sum(h.astype(jnp.float32) * aux[:, 2:3] + aux[:, 3:4],
                axis=0, keepdims=True)          # (1, TB)
    out_ref[...] = jax.nn.sigmoid(v).astype(out_ref.dtype)


def value_forward(x, params, activation="tanh", act_dtype=None):
    """x: (B, state_dim) float32 -> (B, 1) float32 probabilities."""
    act = _ACTIVATIONS[activation]
    if act_dtype is None:
        act_dtype = _default_act_dtype()

    w1, w2, aux = params["w1"], params["w2"], params["aux"]
    B, state_dim = x.shape
    H = w2.shape[0]
    assert w1.shape == (H, state_dim) and aux.shape == (H, 8)

    # ---- batch tile selection -------------------------------------------
    if B <= 256:
        # Small-batch fast path: one 128/256-lane tile, single grid step.
        TB = int(_round_up(max(B, 1), 128))
    else:
        # Large tiles (multiple of 256 -> also multiple of 128 for v5e) to
        # amortize per-grid-step overhead, capped so double-buffered x tiles
        # plus the f32 hidden temps stay well inside the scoped VMEM limit
        # (conservative for v7x's 64 MiB physical VMEM).
        bytes_per_col = 8 * state_dim + 20 * H
        tb_cap = max(256, min(4096, ((20 * 1024 * 1024) // bytes_per_col)
                              // 256 * 256))
        B128 = int(_round_up(B, 128))
        # >= 2 grid steps so a v7x megacore can split the batch.
        n_steps = max(2, pl.cdiv(B128, tb_cap))
        TB = int(min(tb_cap, _round_up(pl.cdiv(B128, n_steps), 256)))
    B_pad = int(_round_up(B, TB))
    if B_pad != B:
        # Only a tail pad when B is not a tile multiple (no extra copy when it
        # is); padded rows stay confined to their own (discarded) lanes.
        x = jnp.pad(x, ((0, B_pad - B), (0, 0)))

    grid = (B_pad // TB,)
    out_row = pl.pallas_call(
        functools.partial(_value_kernel, act=act, act_dtype=act_dtype),
        out_shape=jax.ShapeDtypeStruct((1, B_pad), jnp.float32),
        grid=grid,
        in_specs=[
            pl.BlockSpec((TB, state_dim), lambda i: (i, 0)),  # streamed x tile
            pl.BlockSpec((H, state_dim), lambda i: (0, 0)),   # weights resident
            pl.BlockSpec((H, H), lambda i: (0, 0)),
            pl.BlockSpec((H, 8), lambda i: (0, 0)),           # packed biases/head
        ],
        out_specs=pl.BlockSpec((1, TB), lambda i: (0, i)),
        compiler_params=pltpu.CompilerParams(
            dimension_semantics=("parallel",),  # v7x: shard batch over 2 TCs
        ),
    )(x, w1, w2, aux)

    return out_row[0, :B, None]  # (B, 1)


def init_params(key, state_dim, hidden_size=(128, 128)):
    """torch nn.Linear default init (uniform +/- 1/sqrt(fan_in)); value_head
    weight scaled by 0.1, bias zeroed.  Packed for the kernel:
      w1  : (H, state_dim) bf16   (torch (out, in) layout)
      w2  : (H, H)         bf16
      aux : (H, 8)         f32    col0=b1, col1=b2, col2=w3, col3=b3/H
    """
    h1, h2 = hidden_size
    assert h1 == h2, "kernel packs biases assuming equal hidden sizes"
    H = h1
    ks = jax.random.split(key, 6)

    def linear(kw, kb, din, dout):
        bound = 1.0 / math.sqrt(din)
        w = jax.random.uniform(kw, (dout, din), jnp.float32, -bound, bound)
        b = jax.random.uniform(kb, (dout,), jnp.float32, -bound, bound)
        return w, b

    w1, b1 = linear(ks[0], ks[1], state_dim, H)
    w2, b2 = linear(ks[2], ks[3], H, H)
    w3, b3 = linear(ks[4], ks[5], H, 1)
    w3 = w3 * 0.1   # value_head.weight.data.mul_(0.1)
    b3 = b3 * 0.0   # value_head.bias.data.mul_(0.0)

    aux = jnp.zeros((H, 8), jnp.float32)
    aux = aux.at[:, 0].set(b1)
    aux = aux.at[:, 1].set(b2)
    aux = aux.at[:, 2].set(w3[0, :])
    aux = aux.at[:, 3].set(jnp.full((H,), b3[0] / H, jnp.float32))

    return {
        "w1": w1.astype(jnp.bfloat16),
        "w2": w2.astype(jnp.bfloat16),
        "aux": aux,
    }


def value_reference(x, params, activation="tanh"):
    """Pure-JAX f32 reference using the same (bf16-rounded) weights."""
    act = _ACTIVATIONS[activation]
    w1 = params["w1"].astype(jnp.float32)
    w2 = params["w2"].astype(jnp.float32)
    aux = params["aux"]
    H = w2.shape[0]
    b1, b2, w3 = aux[:, 0], aux[:, 1], aux[:, 2]
    b3 = aux[0, 3] * H
    h = act(x @ w1.T + b1)
    h = act(h @ w2.T + b2)
    v = h @ w3[:, None] + b3
    return jax.nn.sigmoid(v)


if __name__ == "__main__":
    key = jax.random.PRNGKey(0)
    k_x, k_p, k_x2 = jax.random.split(key, 3)

    state_dim = 32
    params = init_params(k_p, state_dim, hidden_size=(128, 128))

    # Small batch: latency fast path (single 128-lane tile).
    x_small = jax.random.normal(k_x, (8, state_dim), jnp.float32)
    out_small = jax.block_until_ready(value_forward(x_small, params))
    ref_small = value_reference(x_small, params)
    assert out_small.shape == (8, 1)
    assert jnp.allclose(out_small, ref_small, atol=1e-2, rtol=0.0), float(
        jnp.max(jnp.abs(out_small - ref_small)))

    # Ragged larger batch: throughput path (2 grid steps + tail padding).
    x_big = jax.random.normal(k_x2, (300, state_dim), jnp.float32)
    out_big = jax.block_until_ready(value_forward(x_big, params))
    ref_big = value_reference(x_big, params)
    assert out_big.shape == (300, 1)
    assert jnp.allclose(out_big, ref_big, atol=1e-2, rtol=0.0), float(
        jnp.max(jnp.abs(out_big - ref_big)))

    print("KERNEL_OK")
</pallas_src>

<mosaic_0001>
module attributes {stable_mosaic.version = 11 : i64} {
  func.func @_value_kernel(%arg0: i32, %arg1: memref<128x32xf32, #tpu.memory_space<vmem>>, %arg2: memref<128x32xbf16, #tpu.memory_space<vmem>>, %arg3: memref<128x128xbf16, #tpu.memory_space<vmem>>, %arg4: memref<128x8xf32, #tpu.memory_space<vmem>>, %arg5: memref<1x128xf32, #tpu.memory_space<vmem>>) attributes {dimension_semantics = [#tpu.dimension_semantics<parallel>], iteration_bounds = array<i64: 1>, scalar_prefetch = 0 : i64, scratch_operands = 0 : i64, tpu.core_type = #tpu.core_type<tc>, window_params = [{transform_indices = @transform_0, window_bounds = array<i64: 128, 32>}, {pipeline_mode = #tpu.pipeline_mode<synchronous>, transform_indices = @transform_1, window_bounds = array<i64: 128, 32>}, {pipeline_mode = #tpu.pipeline_mode<synchronous>, transform_indices = @transform_2, window_bounds = array<i64: 128, 128>}, {pipeline_mode = #tpu.pipeline_mode<synchronous>, transform_indices = @transform_3, window_bounds = array<i64: 128, 8>}, {transform_indices = @transform_4, window_bounds = array<i64: 1, 128>}]} {
    %c0 = arith.constant 0 : index
    %c0_0 = arith.constant 0 : index
    %0 = vector.load %arg4[%c0, %c0_0] : memref<128x8xf32, #tpu.memory_space<vmem>>, vector<128x8xf32>
    %c0_1 = arith.constant 0 : index
    %c0_2 = arith.constant 0 : index
    %1 = vector.load %arg1[%c0_1, %c0_2] : memref<128x32xf32, #tpu.memory_space<vmem>>, vector<128x32xf32>
    %2 = arith.truncf %1 : vector<128x32xf32> to vector<128x32xbf16>
    %c0_3 = arith.constant 0 : index
    %c0_4 = arith.constant 0 : index
    %3 = vector.load %arg2[%c0_3, %c0_4] : memref<128x32xbf16, #tpu.memory_space<vmem>>, vector<128x32xbf16>
    %cst = arith.constant dense<0.000000e+00> : vector<128x128xf32>
    %4 = tpu.matmul %3, %2, %cst {dimension_numbers = #tpu.dot_dimension_numbers<[1], [1], [0], [0], [0, 0, 1, 0], [], []>} : vector<128x32xbf16>, vector<128x32xbf16>, vector<128x128xf32> -> vector<128x128xf32>
    %5 = vector.extract_strided_slice %0 {offsets = [0, 0], sizes = [128, 1], strides = [1, 1]} : vector<128x8xf32> to vector<128x1xf32>
    %6 = vector.broadcast %5 : vector<128x1xf32> to vector<128x128xf32>
    %7 = arith.addf %4, %6 : vector<128x128xf32>
    %8 = math.tanh %7 : vector<128x128xf32>
    %c0_5 = arith.constant 0 : index
    %c0_6 = arith.constant 0 : index
    %9 = vector.load %arg3[%c0_5, %c0_6] : memref<128x128xbf16, #tpu.memory_space<vmem>>, vector<128x128xbf16>
    %10 = arith.truncf %8 : vector<128x128xf32> to vector<128x128xbf16>
    %cst_7 = arith.constant dense<0.000000e+00> : vector<128x128xf32>
    %11 = tpu.matmul %9, %10, %cst_7 {dimension_numbers = #tpu.dot_dimension_numbers<[1], [0], [0], [1], [0, 0, 1, 1], [], []>} : vector<128x128xbf16>, vector<128x128xbf16>, vector<128x128xf32> -> vector<128x128xf32>
    %12 = vector.extract_strided_slice %0 {offsets = [0, 1], sizes = [128, 1], strides = [1, 1]} : vector<128x8xf32> to vector<128x1xf32>
    %13 = vector.broadcast %12 : vector<128x1xf32> to vector<128x128xf32>
    %14 = arith.addf %11, %13 : vector<128x128xf32>
    %15 = math.tanh %14 : vector<128x128xf32>
    %16 = vector.extract_strided_slice %0 {offsets = [0, 2], sizes = [128, 1], strides = [1, 1]} : vector<128x8xf32> to vector<128x1xf32>
    %17 = vector.broadcast %16 : vector<128x1xf32> to vector<128x128xf32>
    %18 = arith.mulf %15, %17 : vector<128x128xf32>
    %19 = vector.extract_strided_slice %0 {offsets = [0, 3], sizes = [128, 1], strides = [1, 1]} : vector<128x8xf32> to vector<128x1xf32>
    %20 = vector.broadcast %19 : vector<128x1xf32> to vector<128x128xf32>
    %21 = arith.addf %18, %20 : vector<128x128xf32>
    %cst_8 = arith.constant dense<0.000000e+00> : vector<128xf32>
    %22 = vector.multi_reduction <add>, %21, %cst_8 [0] : vector<128x128xf32> to vector<128xf32>
    %23 = vector.shape_cast %22 : vector<128xf32> to vector<1x128xf32>
    %24 = arith.negf %23 : vector<1x128xf32>
    %25 = math.exp %24 : vector<1x128xf32>
    %cst_9 = arith.constant 1.000000e+00 : f32
    %26 = vector.broadcast %cst_9 : f32 to vector<1x128xf32>
    %27 = arith.addf %26, %25 : vector<1x128xf32>
    %28 = arith.divf %26, %27 : vector<1x128xf32>
    %c0_10 = arith.constant 0 : index
    %c0_11 = arith.constant 0 : index
    %29 = vector.load %arg5[%c0_10, %c0_11] : memref<1x128xf32, #tpu.memory_space<vmem>>, vector<1x128xf32>
    tpu.vector_store %arg5[%c0_10, %c0_11], %28 {strides = array<i32>} : memref<1x128xf32, #tpu.memory_space<vmem>>, vector<1x128xf32>,
    return
  }
  func.func @transform_0(%arg0: i32) -> (i32, i32) {
    %c0_i32 = arith.constant 0 : i32
    %c0_i32_0 = arith.constant 0 : i32
    return %arg0, %c0_i32 : i32, i32
  }
  func.func @transform_1(%arg0: i32) -> (i32, i32) {
    %c0_i32 = arith.constant 0 : i32
    %c0_i32_0 = arith.constant 0 : i32
    %c0_i32_1 = arith.constant 0 : i32
    return %c0_i32, %c0_i32_0 : i32, i32
  }
  func.func @transform_2(%arg0: i32) -> (i32, i32) {
    %c0_i32 = arith.constant 0 : i32
    %c0_i32_0 = arith.constant 0 : i32
    %c0_i32_1 = arith.constant 0 : i32
    return %c0_i32, %c0_i32_0 : i32, i32
  }
  func.func @transform_3(%arg0: i32) -> (i32, i32) {
    %c0_i32 = arith.constant 0 : i32
    %c0_i32_0 = arith.constant 0 : i32
    %c0_i32_1 = arith.constant 0 : i32
    return %c0_i32, %c0_i32_0 : i32, i32
  }
  func.func @transform_4(%arg0: i32) -> (i32, i32) {
    %c0_i32 = arith.constant 0 : i32
    %c0_i32_0 = arith.constant 0 : i32
    return %c0_i32, %arg0 : i32, i32
  }
}

</mosaic_0001>

<llo_original>
// kernel: tpu_custom_call.1
$region0: #{tpu_custom_call.1}
  #allocation0 [shape = 'u32[]', space=smem, size = 0x4, offset = 0x4, fixed_abs, tag = 'smem constant byte address 0x4 - core index']
  #allocation1 [shape = 'u32[72,128]{1,0:T(1,128)}', space=vmem, size = 0x9000, scoped, tag = 'internal scratch']
  %s0 = inlined_call_operand.vmem [shape: f32[128,32], index: 0, kind: input, shape index: {}]
  %s1 = inlined_call_operand.vmem [shape: bf16[128,32], index: 1, kind: input, shape index: {}]
  %s2 = inlined_call_operand.vmem [shape: bf16[128,128], index: 2, kind: input, shape index: {}]
  %s3 = inlined_call_operand.vmem [shape: f32[128,8], index: 3, kind: input, shape index: {}]
  %s4 = inlined_call_operand.hbm [shape: f32[1,128], index: 4, kind: output, shape index: {}]
  %s5 = sld [smem:[#allocation0]]
  $region26: #{tpu_custom_call.1} parent=0
    _
  %s7 = ssub.s32 1, %s5
  %s8 = scalar_select 0, %s7, %s5
  $region1: #{tpu_custom_call.1} parent=0
    #allocation2 [shape = 'u8[512]{0}', space=vmem, size = 0x400, scoped, tag = 'output window, operand 0, single buffered']
    #allocation3 [shape = 's32[1]{0}', space=sflag, size = 0x4, scoped, tag = 'scoped memory for tpu_custom_call.1']
    %9 = vsyncpa [#allocation3], 0
    // Predicated region
    $region2: #{tpu_custom_call.1} parent=1 // pred_check
      _
    $region3: #{tpu_custom_call.1} parent=1 // pred_check_branch
      %11 = sbr.rel (0) target = $region5
    $region4: #{tpu_custom_call.1} parent=1 // pred_region
      _
    $region5: #{tpu_custom_call.1} parent=1 // pred_fallthru
      _
    // Predicated region
    $region6: #{tpu_custom_call.1} parent=1 // pred_check
      _
    $region7: #{tpu_custom_call.1} parent=1 // pred_check_branch
      %13 = sbr.rel (0) target = $region9
    $region8: #{tpu_custom_call.1} parent=1 // pred_region
      _
    $region9: #{tpu_custom_call.1} parent=1 // pred_fallthru
      _
    // Predicated region
    $region10: #{tpu_custom_call.1} parent=1 // pred_check
      _
    $region11: #{tpu_custom_call.1} parent=1 // pred_check_branch
      %15 = sbr.rel (0) target = $region13
    $region12: #{tpu_custom_call.1} parent=1 // pred_region
      _
    $region13: #{tpu_custom_call.1} parent=1 // pred_fallthru
      _
    // Predicated region
    $region14: #{tpu_custom_call.1} parent=1 // pred_check
      _
    $region15: #{tpu_custom_call.1} parent=1 // pred_check_branch
      %17 = sbr.rel (0) target = $region17
    $region16: #{tpu_custom_call.1} parent=1 // pred_region
      _
    $region17: #{tpu_custom_call.1} parent=1 // pred_fallthru
      _
    %v18 = vld [vmem:[%s3] sm:$0xff]
    %v19 = vld [vmem:[%s3 + $0x8] sm:$0xff]
    %v20 = vld [vmem:[%s3 + $0x10] sm:$0xff]
    %v21 = vld [vmem:[%s3 + $0x18] sm:$0xff]
    %v22 = vld [vmem:[%s3 + $0x20] sm:$0xff]
    %v23 = vld [vmem:[%s3 + $0x28] sm:$0xff]
    %v24 = vld [vmem:[%s3 + $0x30] sm:$0xff]
    %v25 = vld [vmem:[%s3 + $0x38] sm:$0xff]
    %v26 = vld [vmem:[%s3 + $0x40] sm:$0xff]
    %v27 = vld [vmem:[%s3 + $0x48] sm:$0xff]
    %v28 = vld [vmem:[%s3 + $0x50] sm:$0xff]
    %v29 = vld [vmem:[%s3 + $0x58] sm:$0xff]
    %v30 = vld [vmem:[%s3 + $0x60] sm:$0xff]
    %v31 = vld [vmem:[%s3 + $0x68] sm:$0xff]
    %v32 = vld [vmem:[%s3 + $0x70] sm:$0xff]
    %v33 = vld [vmem:[%s3 + $0x78] sm:$0xff]
    %v34 = vld [vmem:[%s0] sm:$0xff]
    %v35 = vld [vmem:[%s0 + $0x8] sm:$0xff]
    %v36 = vld [vmem:[%s0 + $0x10] sm:$0xff]
    %v37 = vld [vmem:[%s0 + $0x18] sm:$0xff]
    %v38 = vld [vmem:[%s0 + $0x20] sm:$0xff]
    %v39 = vld [vmem:[%s0 + $0x28] sm:$0xff]
    %v40 = vld [vmem:[%s0 + $0x30] sm:$0xff]
    %v41 = vld [vmem:[%s0 + $0x38] sm:$0xff]
    %v42 = vld [vmem:[%s0 + $0x40] sm:$0xff]
    %v43 = vld [vmem:[%s0 + $0x48] sm:$0xff]
    %v44 = vld [vmem:[%s0 + $0x50] sm:$0xff]
    %v45 = vld [vmem:[%s0 + $0x58] sm:$0xff]
    %v46 = vld [vmem:[%s0 + $0x60] sm:$0xff]
    %v47 = vld [vmem:[%s0 + $0x68] sm:$0xff]
    %v48 = vld [vmem:[%s0 + $0x70] sm:$0xff]
    %v49 = vld [vmem:[%s0 + $0x78] sm:$0xff]
    %v50 = vpack.c.bf16 %v35, %v34
    %v51 = vpack.c.bf16 %v37, %v36
    %v52 = vpack.c.bf16 %v39, %v38
    %v53 = vpack.c.bf16 %v41, %v40
    %v54 = vpack.c.bf16 %v43, %v42
    %v55 = vpack.c.bf16 %v45, %v44
    %v56 = vpack.c.bf16 %v47, %v46
    %v57 = vpack.c.bf16 %v49, %v48
    %v58 = vld [vmem:[%s1] sm:$0xf]
    %v59 = vld [vmem:[%s1 + $0x4] sm:$0xf]
    %v60 = vld [vmem:[%s1 + $0x8] sm:$0xf]
    %v61 = vld [vmem:[%s1 + $0xc] sm:$0xf]
    %v62 = vld [vmem:[%s1 + $0x10] sm:$0xf]
    %v63 = vld [vmem:[%s1 + $0x14] sm:$0xf]
    %v64 = vld [vmem:[%s1 + $0x18] sm:$0xf]
    %v65 = vld [vmem:[%s1 + $0x1c] sm:$0xf]
    %v66 = vld [vmem:[%s1 + $0x20] sm:$0xf]
    %v67 = vld [vmem:[%s1 + $0x24] sm:$0xf]
    %v68 = vld [vmem:[%s1 + $0x28] sm:$0xf]
    %v69 = vld [vmem:[%s1 + $0x2c] sm:$0xf]
    %v70 = vld [vmem:[%s1 + $0x30] sm:$0xf]
    %v71 = vld [vmem:[%s1 + $0x34] sm:$0xf]
    %v72 = vld [vmem:[%s1 + $0x38] sm:$0xf]
    %v73 = vld [vmem:[%s1 + $0x3c] sm:$0xf]
    %75 = vset.pattern.permute.xlu0 0
    %76 = vperm.xlu0 %75, %v18
    %v77 = vpop.permute.xlu0 %76
    %80 = vset.pattern.permute.xlu0 0
    %81 = vperm.xlu0 %80, %v19
    %v82 = vpop.permute.xlu0 %81
    %85 = vset.pattern.permute.xlu0 0
    %86 = vperm.xlu0 %85, %v20
    %v87 = vpop.permute.xlu0 %86
    %90 = vset.pattern.permute.xlu0 0
    %91 = vperm.xlu0 %90, %v21
    %v92 = vpop.permute.xlu0 %91
    %95 = vset.pattern.permute.xlu0 0
    %96 = vperm.xlu0 %95, %v22
    %v97 = vpop.permute.xlu0 %96
    %100 = vset.pattern.permute.xlu0 0
    %101 = vperm.xlu0 %100, %v23
    %v102 = vpop.permute.xlu0 %101
    %105 = vset.pattern.permute.xlu0 0
    %106 = vperm.xlu0 %105, %v24
    %v107 = vpop.permute.xlu0 %106
    %110 = vset.pattern.permute.xlu0 0
    %111 = vperm.xlu0 %110, %v25
    %v112 = vpop.permute.xlu0 %111
    %115 = vset.pattern.permute.xlu0 0
    %116 = vperm.xlu0 %115, %v26
    %v117 = vpop.permute.xlu0 %116
    %120 = vset.pattern.permute.xlu0 0
    %121 = vperm.xlu0 %120, %v27
    %v122 = vpop.permute.xlu0 %121
    %125 = vset.pattern.permute.xlu0 0
    %126 = vperm.xlu0 %125, %v28
    %v127 = vpop.permute.xlu0 %126
    %130 = vset.pattern.permute.xlu0 0
    %131 = vperm.xlu0 %130, %v29
    %v132 = vpop.permute.xlu0 %131
    %135 = vset.pattern.permute.xlu0 0
    %136 = vperm.xlu0 %135, %v30
    %v137 = vpop.permute.xlu0 %136
    %140 = vset.pattern.permute.xlu0 0
    %141 = vperm.xlu0 %140, %v31
    %v142 = vpop.permute.xlu0 %141
    %145 = vset.pattern.permute.xlu0 0
    %146 = vperm.xlu0 %145, %v32
    %v147 = vpop.permute.xlu0 %146
    %150 = vset.pattern.permute.xlu0 0
    %151 = vperm.xlu0 %150, %v33
    %v152 = vpop.permute.xlu0 %151
    %v170 = vunpack.c.l.b16 %v58
    %v171 = vunpack.c.l.b16 %v59
    %v172 = vunpack.c.l.b16 %v60
    %v173 = vunpack.c.l.b16 %v61
    %v174 = vunpack.c.l.b16 %v62
    %v175 = vunpack.c.l.b16 %v63
    %v176 = vunpack.c.l.b16 %v64
    %v177 = vunpack.c.l.b16 %v65
    %v178 = vunpack.c.l.b16 %v66
    %v179 = vunpack.c.l.b16 %v67
    %v180 = vunpack.c.l.b16 %v68
    %v181 = vunpack.c.l.b16 %v69
    %v182 = vunpack.c.l.b16 %v70
    %v183 = vunpack.c.l.b16 %v71
    %v184 = vunpack.c.l.b16 %v72
    %v185 = vunpack.c.l.b16 %v73
    %v186 = vpack.c.b16 %v171, %v170
    %v187 = vpack.c.b16 %v173, %v172
    %v188 = vpack.c.b16 %v175, %v174
    %v189 = vpack.c.b16 %v177, %v176
    %v190 = vpack.c.b16 %v179, %v178
    %v191 = vpack.c.b16 %v181, %v180
    %v192 = vpack.c.b16 %v183, %v182
    %v193 = vpack.c.b16 %v185, %v184
    %vm194 = vcmask 261120
    %v196 = vsel %vm194, %v186, 0
    %v199 = vsel %vm194, %v187, 0
    %v202 = vsel %vm194, %v188, 0
    %v205 = vsel %vm194, %v189, 0
    %v208 = vsel %vm194, %v190, 0
    %v211 = vsel %vm194, %v191, 0
    %v214 = vsel %vm194, %v192, 0
    %v217 = vsel %vm194, %v193, 0
    %v220 = vsel %vm194, %v50, 0
    %v223 = vsel %vm194, %v51, 0
    %v226 = vsel %vm194, %v52, 0
    %v229 = vsel %vm194, %v53, 0
    %v232 = vsel %vm194, %v54, 0
    %v235 = vsel %vm194, %v55, 0
    %v238 = vsel %vm194, %v56, 0
    %v241 = vsel %vm194, %v57, 0
    %243 = vmatpush.bf16.xpose.msra.mxu0 %v241
    %244 = vmatpush.bf16.xpose.msra.mxu0 %v238
    %245 = vmatpush.bf16.xpose.msra.mxu0 %v235
    %246 = vmatpush.bf16.xpose.msra.mxu0 %v232
    %247 = vmatpush.bf16.xpose.msra.mxu0 %v229
    %248 = vmatpush.bf16.xpose.msra.mxu0 %v226
    %249 = vmatpush.bf16.xpose.msra.mxu0 %v223
    %250 = vmatpush.bf16.xpose.msra.mxu0 %v220
    %251 = vmatmul.bf16.gmra.mxu0 %v196
    %v252 = vpop.f32.mrf.mxu0
    %v253 = vadd.f32 %v77, %v252
    %v254 = vpop.f32.mrf.mxu0
    %v255 = vadd.f32 %v82, %v254
    %256 = vmatmul.bf16.gmra.mxu0 %v199
    %v257 = vpop.f32.mrf.mxu0
    %v258 = vadd.f32 %v87, %v257
    %v259 = vpop.f32.mrf.mxu0
    %v260 = vadd.f32 %v92, %v259
    %261 = vmatmul.bf16.gmra.mxu0 %v202
    %v262 = vpop.f32.mrf.mxu0
    %v263 = vadd.f32 %v97, %v262
    %v264 = vpop.f32.mrf.mxu0
    %v265 = vadd.f32 %v102, %v264
    %266 = vmatmul.bf16.gmra.mxu0 %v205
    %v267 = vpop.f32.mrf.mxu0
    %v268 = vadd.f32 %v107, %v267
    %v269 = vpop.f32.mrf.mxu0
    %v270 = vadd.f32 %v112, %v269
    %271 = vmatmul.bf16.gmra.mxu0 %v208
    %v272 = vpop.f32.mrf.mxu0
    %v273 = vadd.f32 %v117, %v272
    %v274 = vpop.f32.mrf.mxu0
    %v275 = vadd.f32 %v122, %v274
    %276 = vmatmul.bf16.gmra.mxu0 %v211
    %v277 = vpop.f32.mrf.mxu0
    %v278 = vadd.f32 %v127, %v277
    %v279 = vpop.f32.mrf.mxu0
    %v280 = vadd.f32 %v132, %v279
    %281 = vmatmul.bf16.gmra.mxu0 %v214
    %v282 = vpop.f32.mrf.mxu0
    %v283 = vadd.f32 %v137, %v282
    %v284 = vpop.f32.mrf.mxu0
    %v285 = vadd.f32 %v142, %v284
    %286 = vmatmul.bf16.gmra.mxu0 %v217
    %v287 = vpop.f32.mrf.mxu0
    %v288 = vadd.f32 %v147, %v287
    %v289 = vpop.f32.mrf.mxu0
    %v290 = vadd.f32 %v152, %v289
    %291 = vdwg.mxu0
    %v292 = vtanh.pop %v253
    %v293 = vtanh.pop %v255
    %v294 = vtanh.pop %v258
    %v295 = vtanh.pop %v260
    %v296 = vtanh.pop %v263
    %v297 = vtanh.pop %v265
    %v298 = vtanh.pop %v268
    %v299 = vtanh.pop %v270
    %v300 = vtanh.pop %v273
    %v301 = vtanh.pop %v275
    %v302 = vtanh.pop %v278
    %v303 = vtanh.pop %v280
    %v304 = vtanh.pop %v283
    %v305 = vtanh.pop %v285
    %v306 = vtanh.pop %v288
    %v307 = vtanh.pop %v290
    %v308 = vld [vmem:[%s2] sm:$0xf]
    %v309 = vld [vmem:[%s2 + $0x4] sm:$0xf]
    %v310 = vld [vmem:[%s2 + $0x8] sm:$0xf]
    %v311 = vld [vmem:[%s2 + $0xc] sm:$0xf]
    %v312 = vld [vmem:[%s2 + $0x10] sm:$0xf]
    %v313 = vld [vmem:[%s2 + $0x14] sm:$0xf]
    %v314 = vld [vmem:[%s2 + $0x18] sm:$0xf]
    %v315 = vld [vmem:[%s2 + $0x1c] sm:$0xf]
    %v316 = vld [vmem:[%s2 + $0x20] sm:$0xf]
    %v317 = vld [vmem:[%s2 + $0x24] sm:$0xf]
    %v318 = vld [vmem:[%s2 + $0x28] sm:$0xf]
    %v319 = vld [vmem:[%s2 + $0x2c] sm:$0xf]
    %v320 = vld [vmem:[%s2 + $0x30] sm:$0xf]
    %v321 = vld [vmem:[%s2 + $0x34] sm:$0xf]
    %v322 = vld [vmem:[%s2 + $0x38] sm:$0xf]
    %v323 = vld [vmem:[%s2 + $0x3c] sm:$0xf]
    %v324 = vpack.c.bf16 %v293, %v292
    %v325 = vpack.c.bf16 %v295, %v294
    %v326 = vpack.c.bf16 %v297, %v296
    %v327 = vpack.c.bf16 %v299, %v298
    %v328 = vpack.c.bf16 %v301, %v300
    %v329 = vpack.c.bf16 %v303, %v302
    %v330 = vpack.c.bf16 %v305, %v304
    %v331 = vpack.c.bf16 %v307, %v306
    %332 = vset.pattern.permute.xlu0 1
    %333 = vperm.xlu0 %332, %v18
    %v334 = vpop.permute.xlu0 %333
    %336 = vset.pattern.permute.xlu0 1
    %337 = vperm.xlu0 %336, %v19
    %v338 = vpop.permute.xlu0 %337
    %340 = vset.pattern.permute.xlu0 1
    %341 = vperm.xlu0 %340, %v20
    %v342 = vpop.permute.xlu0 %341
    %344 = vset.pattern.permute.xlu0 1
    %345 = vperm.xlu0 %344, %v21
    %v346 = vpop.permute.xlu0 %345
    %348 = vset.pattern.permute.xlu0 1
    %349 = vperm.xlu0 %348, %v22
    %v350 = vpop.permute.xlu0 %349
    %352 = vset.pattern.permute.xlu0 1
    %353 = vperm.xlu0 %352, %v23
    %v354 = vpop.permute.xlu0 %353
    %356 = vset.pattern.permute.xlu0 1
    %357 = vperm.xlu0 %356, %v24
    %v358 = vpop.permute.xlu0 %357
    %360 = vset.pattern.permute.xlu0 1
    %361 = vperm.xlu0 %360, %v25
    %v362 = vpop.permute.xlu0 %361
    %364 = vset.pattern.permute.xlu0 1
    %365 = vperm.xlu0 %364, %v26
    %v366 = vpop.permute.xlu0 %365
    %368 = vset.pattern.permute.xlu0 1
    %369 = vperm.xlu0 %368, %v27
    %v370 = vpop.permute.xlu0 %369
    %372 = vset.pattern.permute.xlu0 1
    %373 = vperm.xlu0 %372, %v28
    %v374 = vpop.permute.xlu0 %373
    %376 = vset.pattern.permute.xlu0 1
    %377 = vperm.xlu0 %376, %v29
    %v378 = vpop.permute.xlu0 %377
    %380 = vset.pattern.permute.xlu0 1
    %381 = vperm.xlu0 %380, %v30
    %v382 = vpop.permute.xlu0 %381
    %384 = vset.pattern.permute.xlu0 1
    %385 = vperm.xlu0 %384, %v31
    %v386 = vpop.permute.xlu0 %385
    %388 = vset.pattern.permute.xlu0 1
    %389 = vperm.xlu0 %388, %v32
    %v390 = vpop.permute.xlu0 %389
    %392 = vset.pattern.permute.xlu0 1
    %393 = vperm.xlu0 %392, %v33
    %v394 = vpop.permute.xlu0 %393
    %v412 = vunpack.c.l.b16 %v308
    %v413 = vunpack.c.l.b16 %v309
    %v414 = vunpack.c.l.b16 %v310
    %v415 = vunpack.c.l.b16 %v311
    %v416 = vunpack.c.l.b16 %v312
    %v417 = vunpack.c.l.b16 %v313
    %v418 = vunpack.c.l.b16 %v314
    %v419 = vunpack.c.l.b16 %v315
    %v420 = vunpack.c.l.b16 %v316
    %v421 = vunpack.c.l.b16 %v317
    %v422 = vunpack.c.l.b16 %v318
    %v423 = vunpack.c.l.b16 %v319
    %v424 = vunpack.c.l.b16 %v320
    %v425 = vunpack.c.l.b16 %v321
    %v426 = vunpack.c.l.b16 %v322
    %v427 = vunpack.c.l.b16 %v323
    %v428 = vpack.c.b16 %v413, %v412
    %v429 = vpack.c.b16 %v415, %v414
    %v430 = vpack.c.b16 %v417, %v416
    %v431 = vpack.c.b16 %v419, %v418
    %v432 = vpack.c.b16 %v421, %v420
    %v433 = vpack.c.b16 %v423, %v422
    %v434 = vpack.c.b16 %v425, %v424
    %v435 = vpack.c.b16 %v427, %v426
    %444 = vmatpush.bf16.msra.mxu0 %v331
    %445 = vmatpush.bf16.msra.mxu0 %v330
    %446 = vmatpush.bf16.msra.mxu0 %v329
    %447 = vmatpush.bf16.msra.mxu0 %v328
    %448 = vmatpush.bf16.msra.mxu0 %v327
    %449 = vmatpush.bf16.msra.mxu0 %v326
    %450 = vmatpush.bf16.msra.mxu0 %v325
    %451 = vmatpush.bf16.msra.mxu0 %v324
    %452 = vmatmul.bf16.gmra.mxu0 %v428
    %v453 = vpop.f32.mrf.mxu0
    %v454 = vadd.f32 %v334, %v453
    %v455 = vpop.f32.mrf.mxu0
    %v456 = vadd.f32 %v338, %v455
    %457 = vmatmul.bf16.gmra.mxu0 %v429
    %v458 = vpop.f32.mrf.mxu0
    %v459 = vadd.f32 %v342, %v458
    %v460 = vpop.f32.mrf.mxu0
    %v461 = vadd.f32 %v346, %v460
    %462 = vmatmul.bf16.gmra.mxu0 %v430
    %v463 = vpop.f32.mrf.mxu0
    %v464 = vadd.f32 %v350, %v463
    %v465 = vpop.f32.mrf.mxu0
    %v466 = vadd.f32 %v354, %v465
    %467 = vmatmul.bf16.gmra.mxu0 %v431
    %v468 = vpop.f32.mrf.mxu0
    %v469 = vadd.f32 %v358, %v468
    %v470 = vpop.f32.mrf.mxu0
    %v471 = vadd.f32 %v362, %v470
    %472 = vmatmul.bf16.gmra.mxu0 %v432
    %v473 = vpop.f32.mrf.mxu0
    %v474 = vadd.f32 %v366, %v473
    %v475 = vpop.f32.mrf.mxu0
    %v476 = vadd.f32 %v370, %v475
    %477 = vmatmul.bf16.gmra.mxu0 %v433
    %v478 = vpop.f32.mrf.mxu0
    %v479 = vadd.f32 %v374, %v478
    %v480 = vpop.f32.mrf.mxu0
    %v481 = vadd.f32 %v378, %v480
    %482 = vmatmul.bf16.gmra.mxu0 %v434
    %v483 = vpop.f32.mrf.mxu0
    %v484 = vadd.f32 %v382, %v483
    %v485 = vpop.f32.mrf.mxu0
    %v486 = vadd.f32 %v386, %v485
    %487 = vmatmul.bf16.gmra.mxu0 %v435
    %v488 = vpop.f32.mrf.mxu0
    %v489 = vadd.f32 %v390, %v488
    %v490 = vpop.f32.mrf.mxu0
    %v491 = vadd.f32 %v394, %v490
    %492 = vdwg.mxu0
    %v493 = vtanh.pop %v454
    %v494 = vtanh.pop %v456
    %v495 = vtanh.pop %v459
    %v496 = vtanh.pop %v461
    %v497 = vtanh.pop %v464
    %v498 = vtanh.pop %v466
    %v499 = vtanh.pop %v469
    %v500 = vtanh.pop %v471
    %v501 = vtanh.pop %v474
    %v502 = vtanh.pop %v476
    %v503 = vtanh.pop %v479
    %v504 = vtanh.pop %v481
    %v505 = vtanh.pop %v484
    %v506 = vtanh.pop %v486
    %v507 = vtanh.pop %v489
    %v508 = vtanh.pop %v491
    %509 = vset.pattern.permute.xlu0 2
    %510 = vperm.xlu0 %509, %v18
    %v511 = vpop.permute.xlu0 %510
    %513 = vset.pattern.permute.xlu0 2
    %514 = vperm.xlu0 %513, %v19
    %v515 = vpop.permute.xlu0 %514
    %517 = vset.pattern.permute.xlu0 2
    %518 = vperm.xlu0 %517, %v20
    %v519 = vpop.permute.xlu0 %518
    %521 = vset.pattern.permute.xlu0 2
    %522 = vperm.xlu0 %521, %v21
    %v523 = vpop.permute.xlu0 %522
    %525 = vset.pattern.permute.xlu0 2
    %526 = vperm.xlu0 %525, %v22
    %v527 = vpop.permute.xlu0 %526
    %529 = vset.pattern.permute.xlu0 2
    %530 = vperm.xlu0 %529, %v23
    %v531 = vpop.permute.xlu0 %530
    %533 = vset.pattern.permute.xlu0 2
    %534 = vperm.xlu0 %533, %v24
    %v535 = vpop.permute.xlu0 %534
    %537 = vset.pattern.permute.xlu0 2
    %538 = vperm.xlu0 %537, %v25
    %v539 = vpop.permute.xlu0 %538
    %541 = vset.pattern.permute.xlu0 2
    %542 = vperm.xlu0 %541, %v26
    %v543 = vpop.permute.xlu0 %542
    %545 = vset.pattern.permute.xlu0 2
    %546 = vperm.xlu0 %545, %v27
    %v547 = vpop.permute.xlu0 %546
    %549 = vset.pattern.permute.xlu0 2
    %550 = vperm.xlu0 %549, %v28
    %v551 = vpop.permute.xlu0 %550
    %553 = vset.pattern.permute.xlu0 2
    %554 = vperm.xlu0 %553, %v29
    %v555 = vpop.permute.xlu0 %554
    %557 = vset.pattern.permute.xlu0 2
    %558 = vperm.xlu0 %557, %v30
    %v559 = vpop.permute.xlu0 %558
    %561 = vset.pattern.permute.xlu0 2
    %562 = vperm.xlu0 %561, %v31
    %v563 = vpop.permute.xlu0 %562
    %565 = vset.pattern.permute.xlu0 2
    %566 = vperm.xlu0 %565, %v32
    %v567 = vpop.permute.xlu0 %566
    %569 = vset.pattern.permute.xlu0 2
    %570 = vperm.xlu0 %569, %v33
    %v571 = vpop.permute.xlu0 %570
    %v573 = vmul.f32 %v493, %v511
    %v574 = vmul.f32 %v494, %v515
    %v575 = vmul.f32 %v495, %v519
    %v576 = vmul.f32 %v496, %v523
    %v577 = vmul.f32 %v497, %v527
    %v578 = vmul.f32 %v498, %v531
    %v579 = vmul.f32 %v499, %v535
    %v580 = vmul.f32 %v500, %v539
    %v581 = vmul.f32 %v501, %v543
    %v582 = vmul.f32 %v502, %v547
    %v583 = vmul.f32 %v503, %v551
    %v584 = vmul.f32 %v504, %v555
    %v585 = vmul.f32 %v505, %v559
    %v586 = vmul.f32 %v506, %v563
    %v587 = vmul.f32 %v507, %v567
    %v588 = vmul.f32 %v508, %v571
    %589 = vset.pattern.permute.xlu0 3
    %590 = vperm.xlu0 %589, %v18
    %v591 = vpop.permute.xlu0 %590
    %593 = vset.pattern.permute.xlu0 3
    %594 = vperm.xlu0 %593, %v19
    %v595 = vpop.permute.xlu0 %594
    %597 = vset.pattern.permute.xlu0 3
    %598 = vperm.xlu0 %597, %v20
    %v599 = vpop.permute.xlu0 %598
    %601 = vset.pattern.permute.xlu0 3
    %602 = vperm.xlu0 %601, %v21
    %v603 = vpop.permute.xlu0 %602
    %605 = vset.pattern.permute.xlu0 3
    %606 = vperm.xlu0 %605, %v22
    %v607 = vpop.permute.xlu0 %606
    %609 = vset.pattern.permute.xlu0 3
    %610 = vperm.xlu0 %609, %v23
    %v611 = vpop.permute.xlu0 %610
    %613 = vset.pattern.permute.xlu0 3
    %614 = vperm.xlu0 %613, %v24
    %v615 = vpop.permute.xlu0 %614
    %617 = vset.pattern.permute.xlu0 3
    %618 = vperm.xlu0 %617, %v25
    %v619 = vpop.permute.xlu0 %618
    %621 = vset.pattern.permute.xlu0 3
    %622 = vperm.xlu0 %621, %v26
    %v623 = vpop.permute.xlu0 %622
    %625 = vset.pattern.permute.xlu0 3
    %626 = vperm.xlu0 %625, %v27
    %v627 = vpop.permute.xlu0 %626
    %629 = vset.pattern.permute.xlu0 3
    %630 = vperm.xlu0 %629, %v28
    %v631 = vpop.permute.xlu0 %630
    %633 = vset.pattern.permute.xlu0 3
    %634 = vperm.xlu0 %633, %v29
    %v635 = vpop.permute.xlu0 %634
    %637 = vset.pattern.permute.xlu0 3
    %638 = vperm.xlu0 %637, %v30
    %v639 = vpop.permute.xlu0 %638
    %641 = vset.pattern.permute.xlu0 3
    %642 = vperm.xlu0 %641, %v31
    %v643 = vpop.permute.xlu0 %642
    %645 = vset.pattern.permute.xlu0 3
    %646 = vperm.xlu0 %645, %v32
    %v647 = vpop.permute.xlu0 %646
    %649 = vset.pattern.permute.xlu0 3
    %650 = vperm.xlu0 %649, %v33
    %v651 = vpop.permute.xlu0 %650
    %v653 = vadd.f32 %v573, %v591
    %v654 = vadd.f32 %v574, %v595
    %v655 = vadd.f32 %v575, %v599
    %v656 = vadd.f32 %v576, %v603
    %v657 = vadd.f32 %v577, %v607
    %v658 = vadd.f32 %v578, %v611
    %v659 = vadd.f32 %v579, %v615
    %v660 = vadd.f32 %v580, %v619
    %v661 = vadd.f32 %v581, %v623
    %v662 = vadd.f32 %v582, %v627
    %v663 = vadd.f32 %v583, %v631
    %v664 = vadd.f32 %v584, %v635
    %v665 = vadd.f32 %v585, %v639
    %v666 = vadd.f32 %v586, %v643
    %v667 = vadd.f32 %v587, %v647
    %v668 = vadd.f32 %v588, %v651
    %v669 = vadd.f32 %v653, %v654
    %v670 = vadd.f32 %v669, %v655
    %v671 = vadd.f32 %v670, %v656
    %v672 = vadd.f32 %v671, %v657
    %v673 = vadd.f32 %v672, %v658
    %v674 = vadd.f32 %v673, %v659
    %v675 = vadd.f32 %v674, %v660
    %v676 = vadd.f32 %v675, %v661
    %v677 = vadd.f32 %v676, %v662
    %v678 = vadd.f32 %v677, %v663
    %v679 = vadd.f32 %v678, %v664
    %v680 = vadd.f32 %v679, %v665
    %v681 = vadd.f32 %v680, %v666
    %v682 = vadd.f32 %v681, %v667
    %v683 = vadd.f32 %v682, %v668
    %v684 = vrot.slane %v683, 4
    %v685 = vadd.f32 %v683, %v684
    %v686 = vrot.slane %v685, 2
    %v687 = vadd.f32 %v685, %v686
    %v688 = vrot.slane %v687, 1
    %v689 = vadd.f32 %v687, %v688
    %v690 = vxor.u32 %v689, 2147483648
    %v691 = vmul.f32 %v690, 1.442695
    %v692 = vpow.pop %v691
    %v693 = vadd.f32 %v692, 1.0
    %v694 = vrcp.pop %v693
    %v695 = vmul.f32 %v693, %v694
    %v696 = vsub.f32 1.0, %v695
    %v697 = vmul.f32 %v694, %v696
    %v698 = vadd.f32 %v694, %v697
    %vm699 = vweird.f32 %v693
    %vm700 = vweird.f32 %v694
    %vm701 = vmor %vm699, %vm700
    %v702 = vsel %vm701, %v694, %v698
    %v703 = vand.u32 2147483647, %v693
    %vm704 = vcmp.eq.f32.partialorder %v703, 8.507059e+37
    %v705 = vand.u32 %v693, 2147483648
    %v706 = vor.u32 1.1754944e-38, %v705
    %v707 = vsel %vm704, %v706, %v702
    %v708 = vmul.f32 1.0, %v707
    %709 = vst [vmem:[#allocation2] sm:$0x1] %v708
    // Predicated region
    $region18: #{tpu_custom_call.1} parent=1 // pred_check
      _
    $region19: #{tpu_custom_call.1} parent=1 // pred_check_branch
      %711 = sbr.rel (0) target = $region21
    $region20: #{tpu_custom_call.1} parent=1 // pred_region
      %713 = vsyncadd [#allocation3], 0
      %s715 = sshll.u32 [#allocation2], 4
      %s716 = int_to_ptr.vmem [resolvable:$true] %s715
      %s717 = sshll.u32 %s4, 4
      %s718 = int_to_ptr.hbm [resolvable:$true] %s717
      %720 = dma.vmem_to_hbm [thread:$0]  %s716, 16, %s718, [#allocation3]
    $region21: #{tpu_custom_call.1} parent=1 // pred_fallthru
      _
    // Predicated region
    $region22: #{tpu_custom_call.1} parent=1 // pred_check
      _
    $region23: #{tpu_custom_call.1} parent=1 // pred_check_branch
      %722 = sbr.rel (0) target = $region25
    $region24: #{tpu_custom_call.1} parent=1 // pred_region
      %724 = dma.done [#allocation3], 16
    $region25: #{tpu_custom_call.1} parent=1 // pred_fallthru
      _
    %725 = vsyncpa [#allocation3], 1

</llo_original>
